<compile_context>
chip_gen: v6e
topology: v6e:2x2x1
jax: 0.10.0
libtpu: 0.0.40
codegen_flags: <defaults>
</compile_context>

<pallas_src>
import functools

import jax
import jax.numpy as jnp
from jax import lax
from jax.experimental import pallas as pl
from jax.experimental.pallas import tpu as pltpu

BN_EPS = 1e-5
_LANE = 128
_PAD_Q = 2048   # vocab padding quantum for large vocabs (guarantees a decent tile divisor)


def _round_up(n, m):
    return ((n + m - 1) // m) * m


def _vmem_caps():
    """(working-set budget, scoped vmem limit) in bytes, conservative across generations."""
    try:
        phys = pltpu.get_tpu_info().vmem_capacity_bytes   # 64 MiB v7x, 128 MiB v5e/v6e
    except Exception:
        phys = 64 << 20                                   # assume the smallest (v7x)
    return int(phys * 0.55), int(phys * 0.75)


def _choose_v_tile(B, T, v_pad, tile_budget):
    """Largest lane-dense tile dividing v_pad such that the per-tile working set
    (double-buffered bf16 weight + ~4 f32 (B, tv) temporaries) fits tile_budget."""
    per_col = 2 * (T * 2) + 4 * (B * 4)
    cap = min(max(tile_budget, 0) // per_col, v_pad, 32 * 1024)
    cap = max((cap // _LANE) * _LANE, _LANE)
    for tv in range(cap, 0, -_LANE):
        if v_pad % tv == 0:
            return tv
    return _LANE


def prepare_decoder_params(beta_weight, dtype=jnp.bfloat16):
    """One-time init-side prep of nn.Linear(num_topics, vocab).weight (shape (V, T)):
    transpose to (T, V), cast to bf16, zero-pad V to a lane-friendly multiple.
    Returns (wt_padded, vocab_size)."""
    w = jnp.asarray(beta_weight, dtype=dtype).T           # (T, V)
    _, V = w.shape
    quantum = _LANE if V <= _PAD_Q else _PAD_Q
    v_pad = _round_up(V, quantum)
    if v_pad != V:
        w = jnp.pad(w, ((0, 0), (0, v_pad - V)))
    return w, V


# ------------------------------- kernels -------------------------------------


def _bn_z_tile(x_ref, w_ref):
    """(B,T)@(T,tv) bf16 matmul (f32 acc) + per-column BatchNorm1d(affine=False).
    Variance via E[z^2] - E[z]^2 in one reduction pass (f32, eps=1e-5)."""
    logits = jnp.dot(x_ref[...], w_ref[...], preferred_element_type=jnp.float32)
    mean = jnp.mean(logits, axis=0, keepdims=True)
    mean_sq = jnp.mean(logits * logits, axis=0, keepdims=True)
    var = mean_sq - mean * mean
    return (logits - mean) * lax.rsqrt(var + BN_EPS)


def _small_kernel(x_ref, w_ref, o_ref, *, v_valid):
    """Small-problem fast path: one block -> matmul + BN + plain softmax."""
    z = _bn_z_tile(x_ref, w_ref)
    col = lax.broadcasted_iota(jnp.int32, z.shape, 1)
    z = jnp.where(col < v_valid, z, -jnp.inf)
    m = jnp.max(z, axis=1, keepdims=True)
    lse = m + jnp.log(jnp.sum(jnp.exp(z - m), axis=1, keepdims=True))
    o_ref[...] = jnp.exp(z - lse)


def _fused_kernel(x_ref, w_ref, o_ref, m_sc, l_sc, *, v_tile, v_valid):
    """Fused single pass: weight streamed once; BN'd logits stashed into the
    VMEM-resident (B, V_pad) output; online lse; exp-normalize at the last tile."""
    j = pl.program_id(0)

    @pl.when(j == 0)
    def _():
        m_sc[...] = jnp.full_like(m_sc, -jnp.inf)
        l_sc[...] = jnp.zeros_like(l_sc)

    z = _bn_z_tile(x_ref, w_ref)                                       # (B, tv) f32
    col = j * v_tile + lax.broadcasted_iota(jnp.int32, z.shape, 1)
    valid = col < v_valid
    zm = jnp.where(valid, z, -jnp.inf)

    start = pl.multiple_of(j * v_tile, _LANE)
    o_ref[:, pl.ds(start, v_tile)] = z                                 # stash z (resident block)

    m_prev = m_sc[...]
    m_new = jnp.maximum(m_prev, jnp.max(zm, axis=1, keepdims=True))
    l_sc[...] = (l_sc[...] * jnp.exp(m_prev - m_new)
                 + jnp.sum(jnp.where(valid, jnp.exp(z - m_new), 0.0), axis=1, keepdims=True))
    m_sc[...] = m_new

    @pl.when(j == pl.num_programs(0) - 1)
    def _():
        lse = m_sc[...] + jnp.log(l_sc[...])                           # (B, 1)
        o_ref[...] = jnp.exp(o_ref[...] - lse)                         # padded tail sliced by wrapper


def _z_stats_kernel(x_ref, w_ref, z_out, m_out, l_out, *, v_tile, v_valid):
    """Fallback pass 1: emit BN'd logits z tiles + online (m, l). m_out/l_out are the
    resident accumulators themselves (index_map -> (0,0)), no extra scratch."""
    j = pl.program_id(0)

    @pl.when(j == 0)
    def _():
        m_out[...] = jnp.full_like(m_out, -jnp.inf)
        l_out[...] = jnp.zeros_like(l_out)

    z = _bn_z_tile(x_ref, w_ref)
    col = j * v_tile + lax.broadcasted_iota(jnp.int32, z.shape, 1)
    valid = col < v_valid
    zm = jnp.where(valid, z, -jnp.inf)
    z_out[...] = z

    m_prev = m_out[...]
    m_new = jnp.maximum(m_prev, jnp.max(zm, axis=1, keepdims=True))
    l_out[...] = (l_out[...] * jnp.exp(m_prev - m_new)
                  + jnp.sum(jnp.where(valid, jnp.exp(z - m_new), 0.0), axis=1, keepdims=True))
    m_out[...] = m_new


def _normalize_kernel(z_ref, lse_ref, o_ref):
    """Fallback pass 2: pure elementwise softmax finalize (no weight, no matmul)."""
    o_ref[...] = jnp.exp(z_ref[...] - lse_ref[...])


# ------------------------------- wrapper -------------------------------------


def decoder_forward(x, wt, *, vocab_size=None, v_tile=None, force_two_pass=False):
    """Decoder forward: softmax(BatchNorm1d(x @ beta.T), dim=1).

    x : (B, T) activations (dropout = eval-mode identity).
    wt: (T, V_pad) pre-transposed, bf16, lane-padded weight from prepare_decoder_params.
    vocab_size: original (un-padded) vocab size (defaults to wt.shape[1]).
    """
    B, T = x.shape
    Tw, v_pad = wt.shape
    assert Tw == T, "weight must be pre-transposed to (num_topics, vocab_padded)"
    V = int(vocab_size) if vocab_size is not None else v_pad
    assert V <= v_pad and v_pad % _LANE == 0

    x = x.astype(jnp.bfloat16)      # MXU inputs bf16; BN/softmax epilogue stays f32
    wt = wt.astype(jnp.bfloat16)    # no-op if prepared via prepare_decoder_params

    budget, vmem_limit = _vmem_caps()
    resident = B * v_pad * 4 + B * T * 2 + 256                 # resident output + x + stats
    min_tile_bytes = (2 * (T * 2) + 4 * (B * 4)) * _LANE
    use_fused = (not force_two_pass) and (resident + min_tile_bytes <= budget)

    if v_tile is not None:
        tv = int(v_tile)
        assert tv % _LANE == 0 and v_pad % tv == 0
    else:
        tile_budget = budget - (resident if use_fused else (B * T * 2 + 1024))
        tv = _choose_v_tile(B, T, v_pad, tile_budget)
    nvt = v_pad // tv

    flops = 2 * B * T * v_pad
    bytes_io = x.size * 2 + wt.size * 2 + B * v_pad * 4

    x_spec = pl.BlockSpec((B, T), lambda j: (0, 0))            # resident across V tiles
    w_spec = pl.BlockSpec((T, tv), lambda j: (0, j))           # streamed, double-buffered
    stat_spec = pl.BlockSpec((B, 1), lambda j: (0, 0))         # resident accumulators
    seq_params = pltpu.CompilerParams(dimension_semantics=(pltpu.ARBITRARY,),
                                      vmem_limit_bytes=vmem_limit)

    if use_fused and nvt == 1:
        # Small-problem fast path: one block, no flash machinery.
        out = pl.pallas_call(
            functools.partial(_small_kernel, v_valid=V),
            out_shape=jax.ShapeDtypeStruct((B, v_pad), jnp.float32),
            compiler_params=pltpu.CompilerParams(vmem_limit_bytes=vmem_limit),
            cost_estimate=pl.CostEstimate(flops=flops, transcendentals=2 * B * v_pad,
                                          bytes_accessed=bytes_io),
        )(x, wt)
    elif use_fused:
        # Fused single pass with VMEM-resident (B, V_pad) output.
        out = pl.pallas_call(
            functools.partial(_fused_kernel, v_tile=tv, v_valid=V),
            out_shape=jax.ShapeDtypeStruct((B, v_pad), jnp.float32),
            grid=(nvt,),
            in_specs=[x_spec, w_spec],
            out_specs=pl.BlockSpec((B, v_pad), lambda j: (0, 0)),
            scratch_shapes=[pltpu.VMEM((B, 1), jnp.float32),
                            pltpu.VMEM((B, 1), jnp.float32)],
            compiler_params=seq_params,
            cost_estimate=pl.CostEstimate(flops=flops, transcendentals=2 * B * v_pad,
                                          bytes_accessed=bytes_io),
        )(x, wt)
    else:
        # Large-working-set fallback: cache z in HBM (single weight read), then a
        # pure elementwise normalize pass, PARALLEL over V tiles.
        z, m, l = pl.pallas_call(
            functools.partial(_z_stats_kernel, v_tile=tv, v_valid=V),
            out_shape=(jax.ShapeDtypeStruct((B, v_pad), jnp.float32),
                       jax.ShapeDtypeStruct((B, 1), jnp.float32),
                       jax.ShapeDtypeStruct((B, 1), jnp.float32)),
            grid=(nvt,),
            in_specs=[x_spec, w_spec],
            out_specs=(pl.BlockSpec((B, tv), lambda j: (0, j)), stat_spec, stat_spec),
            compiler_params=seq_params,
            cost_estimate=pl.CostEstimate(flops=flops, transcendentals=B * v_pad,
                                          bytes_accessed=bytes_io),
        )(x, wt)
        lse = m + jnp.log(l)                                   # (B, 1) fold, trivial
        out = pl.pallas_call(
            _normalize_kernel,
            out_shape=jax.ShapeDtypeStruct((B, v_pad), jnp.float32),
            grid=(nvt,),
            in_specs=[pl.BlockSpec((B, tv), lambda j: (0, j)), stat_spec],
            out_specs=pl.BlockSpec((B, tv), lambda j: (0, j)),
            compiler_params=pltpu.CompilerParams(dimension_semantics=(pltpu.PARALLEL,),
                                                 vmem_limit_bytes=vmem_limit),
            cost_estimate=pl.CostEstimate(flops=0, transcendentals=B * v_pad,
                                          bytes_accessed=2 * B * v_pad * 4),
        )(z, lse)

    return out[:, :V] if V != v_pad else out


def decoder_reference(x, beta_weight):
    """Pure-JAX f32 reference (PyTorch semantics: eval dropout, batch-stat BN, softmax dim=1)."""
    logits = x @ beta_weight.T
    mean = jnp.mean(logits, axis=0, keepdims=True)
    var = jnp.mean((logits - mean) ** 2, axis=0, keepdims=True)
    normed = (logits - mean) / jnp.sqrt(var + BN_EPS)
    return jax.nn.softmax(normed, axis=1)


if __name__ == "__main__":
    # Small shapes consistent with the module: batch=8, num_topics=16, vocab=256.
    B, T, V = 8, 16, 256
    key = jax.random.PRNGKey(0)
    kx, kw = jax.random.split(key)
    x = jax.random.normal(kx, (B, T), dtype=jnp.float32)
    # nn.Linear(num_topics, vocab, bias=False).weight has shape (vocab, num_topics).
    beta_weight = jax.random.normal(kw, (V, T), dtype=jnp.float32) * 0.05

    def check(out, beta, v, tag):
        ref = decoder_reference(x, beta)
        assert out.shape == (B, v), tag
        assert jnp.allclose(jnp.sum(out, axis=1), jnp.ones((B,)), atol=1e-3), f"{tag}: row sums"
        assert jnp.allclose(out, ref, atol=5e-3, rtol=1e-1), f"{tag}: mismatch vs f32 reference"

    # 1) Default dispatch -> small-problem single-block fast path.
    wt, v_valid = prepare_decoder_params(beta_weight)
    fwd = jax.jit(functools.partial(decoder_forward, vocab_size=v_valid))
    check(jax.block_until_ready(fwd(x, wt)), beta_weight, V, "fast-path")

    # 2) Forced multi-tile -> fused single-pass (resident output) flash-softmax path.
    fwd = jax.jit(functools.partial(decoder_forward, vocab_size=v_valid, v_tile=128))
    check(jax.block_until_ready(fwd(x, wt)), beta_weight, V, "fused")

    # 3) Forced fallback -> two-pass cached-z path.
    fwd = jax.jit(functools.partial(decoder_forward, vocab_size=v_valid, v_tile=128,
                                    force_two_pass=True))
    check(jax.block_until_ready(fwd(x, wt)), beta_weight, V, "two-pass")

    # 4) Non-multiple-of-128 vocab -> padded weight + masked tail columns.
    V2 = 200
    beta2 = beta_weight[:V2]
    wt2, v2 = prepare_decoder_params(beta2)
    fwd = jax.jit(functools.partial(decoder_forward, vocab_size=v2, v_tile=128))
    check(jax.block_until_ready(fwd(x, wt2)), beta2, V2, "padded-vocab")

    print("KERNEL_OK")
</pallas_src>

<mosaic_0001>
module attributes {stable_mosaic.version = 11 : i64} {
  func.func @_small_kernel(%arg0: memref<8x16xbf16, #tpu.memory_space<vmem>>, %arg1: memref<16x256xbf16, #tpu.memory_space<vmem>>, %arg2: memref<8x256xf32, #tpu.memory_space<vmem>>) attributes {dimension_semantics = [], scalar_prefetch = 0 : i64, scratch_operands = 0 : i64, tpu.core_type = #tpu.core_type<tc>} {
    %c0 = arith.constant 0 : index
    %c0_0 = arith.constant 0 : index
    %0 = vector.load %arg0[%c0, %c0_0] : memref<8x16xbf16, #tpu.memory_space<vmem>>, vector<8x16xbf16>
    %c0_1 = arith.constant 0 : index
    %c0_2 = arith.constant 0 : index
    %1 = vector.load %arg1[%c0_1, %c0_2] : memref<16x256xbf16, #tpu.memory_space<vmem>>, vector<16x256xbf16>
    %cst = arith.constant dense<0.000000e+00> : vector<8x256xf32>
    %2 = tpu.matmul %0, %1, %cst {dimension_numbers = #tpu.dot_dimension_numbers<[1], [0], [0], [1], [0, 0, 1, 1], [], []>} : vector<8x16xbf16>, vector<16x256xbf16>, vector<8x256xf32> -> vector<8x256xf32>
    %cst_3 = arith.constant dense<0.000000e+00> : vector<256xf32>
    %3 = vector.multi_reduction <add>, %2, %cst_3 [0] : vector<8x256xf32> to vector<256xf32>
    %4 = vector.shape_cast %3 : vector<256xf32> to vector<1x256xf32>
    %cst_4 = arith.constant 8.000000e+00 : f32
    %5 = vector.broadcast %cst_4 : f32 to vector<1x256xf32>
    %6 = arith.divf %4, %5 : vector<1x256xf32>
    %7 = arith.mulf %2, %2 : vector<8x256xf32>
    %cst_5 = arith.constant dense<0.000000e+00> : vector<256xf32>
    %8 = vector.multi_reduction <add>, %7, %cst_5 [0] : vector<8x256xf32> to vector<256xf32>
    %9 = vector.shape_cast %8 : vector<256xf32> to vector<1x256xf32>
    %cst_6 = arith.constant 8.000000e+00 : f32
    %10 = vector.broadcast %cst_6 : f32 to vector<1x256xf32>
    %11 = arith.divf %9, %10 : vector<1x256xf32>
    %12 = arith.mulf %6, %6 : vector<1x256xf32>
    %13 = arith.subf %11, %12 : vector<1x256xf32>
    %14 = vector.broadcast %6 : vector<1x256xf32> to vector<8x256xf32>
    %15 = arith.subf %2, %14 : vector<8x256xf32>
    %cst_7 = arith.constant 9.99999974E-6 : f32
    %16 = vector.broadcast %cst_7 : f32 to vector<1x256xf32>
    %17 = arith.addf %13, %16 : vector<1x256xf32>
    %18 = math.rsqrt %17 : vector<1x256xf32>
    %19 = vector.broadcast %18 : vector<1x256xf32> to vector<8x256xf32>
    %20 = arith.mulf %15, %19 : vector<8x256xf32>
    %21 = tpu.iota {dimensions = array<i32: 1>} : vector<8x256xi32>
    %c256_i32 = arith.constant 256 : i32
    %22 = vector.broadcast %c256_i32 : i32 to vector<8x256xi32>
    %23 = arith.cmpi slt, %21, %22 : vector<8x256xi32>
    %cst_8 = arith.constant 0xFF800000 : f32
    %24 = vector.broadcast %cst_8 : f32 to vector<8x256xf32>
    %25 = arith.select %23, %20, %24 : vector<8x256xi1>, vector<8x256xf32>
    %cst_9 = arith.constant dense<0xFF800000> : vector<8xf32>
    %26 = vector.multi_reduction <maximumf>, %25, %cst_9 [1] : vector<8x256xf32> to vector<8xf32>
    %27 = vector.shape_cast %26 : vector<8xf32> to vector<8x1xf32>
    %28 = vector.broadcast %27 : vector<8x1xf32> to vector<8x256xf32>
    %29 = arith.subf %25, %28 : vector<8x256xf32>
    %30 = math.exp %29 : vector<8x256xf32>
    %cst_10 = arith.constant dense<0.000000e+00> : vector<8xf32>
    %31 = vector.multi_reduction <add>, %30, %cst_10 [1] : vector<8x256xf32> to vector<8xf32>
    %32 = vector.shape_cast %31 : vector<8xf32> to vector<8x1xf32>
    %33 = math.log %32 : vector<8x1xf32>
    %34 = arith.addf %27, %33 : vector<8x1xf32>
    %35 = vector.broadcast %34 : vector<8x1xf32> to vector<8x256xf32>
    %36 = arith.subf %25, %35 : vector<8x256xf32>
    %37 = math.exp %36 : vector<8x256xf32>
    %c0_11 = arith.constant 0 : index
    %c0_12 = arith.constant 0 : index
    %38 = vector.load %arg2[%c0_11, %c0_12] : memref<8x256xf32, #tpu.memory_space<vmem>>, vector<8x256xf32>
    tpu.vector_store %arg2[%c0_11, %c0_12], %37 {strides = array<i32>} : memref<8x256xf32, #tpu.memory_space<vmem>>, vector<8x256xf32>,
    return
  }
}

</mosaic_0001>

<llo_original>
// kernel: decoder_forward.1
$region0: #{decoder_forward.1}
  #allocation0 [shape = 'u32[]', space=smem, size = 0x4, offset = 0x4, fixed_abs, tag = 'smem constant byte address 0x4 - core index']
  #allocation1 [shape = 'u32[144,128]{1,0:T(1,128)}', space=vmem, size = 0x12000, scoped, tag = 'internal scratch']
  %s0 = inlined_call_operand.vmem [shape: bf16[8,16], index: 0, kind: input, shape index: {}]
  %s1 = inlined_call_operand.hbm [shape: bf16[16,256], index: 1, kind: input, shape index: {}]
  %s2 = inlined_call_operand.hbm [shape: f32[8,256], index: 2, kind: output, shape index: {}]
  %s3 = sld [smem:[#allocation0]]
  $region22: #{decoder_forward.1} parent=0
    _
  %s5 = ssub.s32 1, %s3
  %s6 = scalar_select 0, %s5, %s3
  $region1: #{decoder_forward.1} parent=0
    #allocation2 [shape = 'u8[8192]{0}', space=vmem, size = 0x2000, scoped, tag = 'input window, operand 1, single buffered']
    #allocation3 [shape = 's32[1]{0}', space=sflag, size = 0x4, scoped, tag = 'scoped memory for decoder_forward.1']
    #allocation4 [shape = 's32[1]{0}', space=sflag, size = 0x4, scoped, tag = 'scoped memory for decoder_forward.1']
    #allocation5 [shape = 'u8[8192]{0}', space=vmem, size = 0x2000, scoped, tag = 'output window, operand 0, single buffered']
    %7 = vsyncpa [#allocation3], 0
    %8 = vsyncpa [#allocation4], 0
    // Predicated region
    $region2: #{decoder_forward.1} parent=1 // pred_check
      _
    $region3: #{decoder_forward.1} parent=1 // pred_check_branch
      %10 = sbr.rel (0) target = $region5
    $region4: #{decoder_forward.1} parent=1 // pred_region
      _
    $region5: #{decoder_forward.1} parent=1 // pred_fallthru
      _
    // Predicated region
    $region6: #{decoder_forward.1} parent=1 // pred_check
      _
    $region7: #{decoder_forward.1} parent=1 // pred_check_branch
      %12 = sbr.rel (0) target = $region9
    $region8: #{decoder_forward.1} parent=1 // pred_region
      %s14 = ssub.s32 256, 256
      %15 = vsyncadd [#allocation3], %s14
      %s16 = sshll.u32 [#allocation2], 4
      %s17 = int_to_ptr.vmem [resolvable:$true] %s16
      %22 = dma.hbm_to_vmem [thread:$0]  %s1, 256, %s17, [#allocation3], 128, 128, 8
    $region9: #{decoder_forward.1} parent=1 // pred_fallthru
      _
    // Predicated region
    $region10: #{decoder_forward.1} parent=1 // pred_check
      _
    $region11: #{decoder_forward.1} parent=1 // pred_check_branch
      %24 = sbr.rel (0) target = $region13
    $region12: #{decoder_forward.1} parent=1 // pred_region
      %25 = dma.done [#allocation3], 256
    $region13: #{decoder_forward.1} parent=1 // pred_fallthru
      _
    %v27 = vld [vmem:[%s0] sm:$0xf]
    %v28 = vld [vmem:[#allocation2] sm:$0xff]
    %v29 = vld [vmem:[#allocation2 + $0x8] sm:$0xff]
    %v32 = vunpack.c.l.b16 %v28
    %v33 = vunpack.c.h.b16 %v28
    %v34 = vunpack.c.l.b16 %v29
    %v35 = vunpack.c.h.b16 %v29
    %v36 = vpack.c.b16 %v34, %v32
    %v37 = vpack.c.b16 %v35, %v33
    %vm40 = vcmask 130048
    %v42 = vsel %vm40, %v27, 0
    %44 = vmatprep.subr.bf16.mxu0 0
    %45 = vmatpush1.bf16.msra.mxu0 0
    %46 = vmatprep.subr.bf16.mxu0 0
    %47 = vmatpush1.bf16.msra.mxu0 0
    %48 = vmatprep.subr.bf16.mxu0 0
    %49 = vmatpush1.bf16.msra.mxu0 0
    %50 = vmatprep.subr.bf16.mxu0 0
    %51 = vmatpush1.bf16.msra.mxu0 0
    %52 = vmatprep.subr.bf16.mxu0 0
    %53 = vmatpush1.bf16.msra.mxu0 0
    %54 = vmatprep.subr.bf16.mxu0 0
    %55 = vmatpush1.bf16.msra.mxu0 0
    %56 = vmatprep.subr.bf16.mxu0 0
    %57 = vmatpush1.bf16.msra.mxu0 0
    %58 = vmatprep.subr.bf16.mxu0 %v37
    %59 = vmatpush1.bf16.msra.mxu0 %v36
    %60 = vmatprep.subr.bf16.mxu0 0
    %61 = vmatpush2.bf16.msra.mxu0 0
    %62 = vmatprep.subr.bf16.mxu0 0
    %63 = vmatpush2.bf16.msra.mxu0 0
    %64 = vmatprep.subr.bf16.mxu0 0
    %65 = vmatpush2.bf16.msra.mxu0 0
    %66 = vmatprep.subr.bf16.mxu0 0
    %67 = vmatpush2.bf16.msra.mxu0 0
    %68 = vmatprep.subr.bf16.mxu0 0
    %69 = vmatpush2.bf16.msra.mxu0 0
    %70 = vmatprep.subr.bf16.mxu0 0
    %71 = vmatpush2.bf16.msra.mxu0 0
    %72 = vmatprep.subr.bf16.mxu0 0
    %73 = vmatpush2.bf16.msra.mxu0 0
    %74 = vmatprep.subr.bf16.mxu0 0
    %75 = vmatpush2.bf16.msra.mxu0 0
    %76 = vmatprep.mubr.bf16.mxu0 0
    %77 = vmatmul.mubr.bf16.gmra.mxu0 %v42
    %v78 = vpop.f32.mrf.mxu0
    %v79 = vadd.f32 0.0, %v78
    %v80 = vpop.f32.mrf.mxu0
    %v81 = vadd.f32 0.0, %v80
    %v82 = vpop.f32.mrf.mxu0
    %v83 = vpop.f32.mrf.mxu0
    %84 = vdwg.mxu0
    %v85 = vrot.slane %v79, 4
    %v86 = vadd.f32 %v79, %v85
    %v87 = vrot.slane %v86, 2
    %v88 = vadd.f32 %v86, %v87
    %v89 = vrot.slane %v88, 1
    %v90 = vadd.f32 %v88, %v89
    %v91 = vrot.slane %v81, 4
    %v92 = vadd.f32 %v81, %v91
    %v93 = vrot.slane %v92, 2
    %v94 = vadd.f32 %v92, %v93
    %v95 = vrot.slane %v94, 1
    %v96 = vadd.f32 %v94, %v95
    %v97 = vrcp.pop 8.0
    %v98 = vmul.f32 %v90, %v97
    %v99 = vmul.f32 %v96, %v97
    %v100 = vmul.f32 %v79, %v79
    %v101 = vmul.f32 %v81, %v81
    %v102 = vrot.slane %v100, 4
    %v103 = vadd.f32 %v100, %v102
    %v104 = vrot.slane %v103, 2
    %v105 = vadd.f32 %v103, %v104
    %v106 = vrot.slane %v105, 1
    %v107 = vadd.f32 %v105, %v106
    %v108 = vrot.slane %v101, 4
    %v109 = vadd.f32 %v101, %v108
    %v110 = vrot.slane %v109, 2
    %v111 = vadd.f32 %v109, %v110
    %v112 = vrot.slane %v111, 1
    %v113 = vadd.f32 %v111, %v112
    %v114 = vmul.f32 %v107, %v97
    %v115 = vmul.f32 %v113, %v97
    %v116 = vmul.f32 %v98, %v98
    %v117 = vmul.f32 %v99, %v99
    %v118 = vsub.f32 %v114, %v116
    %v119 = vsub.f32 %v115, %v117
    %v120 = vsub.f32 %v79, %v98
    %v121 = vsub.f32 %v81, %v99
    %v122 = vadd.f32 %v118, 1e-05
    %v123 = vadd.f32 %v119, 1e-05
    %v124 = vrsqrt.pop %v122
    %v125 = vrsqrt.pop %v123
    %v126 = vmul.f32 %v120, %v124
    %v127 = vmul.f32 %v121, %v125
    %v128 = vlaneseq
    %v129 = vand.u32 %v128, 127
    %v130 = vadd.s32 %v129, 128
    %vm131 = vcmp.lt.s32.totalorder %v129, 256
    %vm132 = vcmp.lt.s32.totalorder %v130, 256
    %v133 = vsel %vm131, %v126, -inf
    %v134 = vsel %vm132, %v127, -inf
    %v135 = vmax.f32 %v133, %v134
    %136 = vmax.xlane.f32.xlu0 %v135
    %v137 = vpop.xlane.xlu0 %136
    %v138 = vsub.f32 %v133, %v137
    %v139 = vsub.f32 %v134, %v137
    %v140 = vmul.f32 %v138, 1.442695
    %v141 = vpow.pop %v140
    %v142 = vmul.f32 %v139, 1.442695
    %v143 = vpow.pop %v142
    %v144 = vadd.f32 %v141, %v143
    %145 = vadd.xlane.f32.xlu0 %v144
    %v146 = vpop.xlane.xlu0 %145
    %v147 = vlog2.pop %v146
    %v148 = vmul.f32 %v147, 0.6931472
    %v149 = vadd.f32 %v137, %v148
    %v150 = vsub.f32 %v133, %v149
    %v151 = vsub.f32 %v134, %v149
    %v152 = vmul.f32 %v150, 1.442695
    %v153 = vpow.pop %v152
    %v154 = vmul.f32 %v151, 1.442695
    %v155 = vpow.pop %v154
    %156 = vst [vmem:[#allocation5] sm:$0xff] %v153
    %157 = vst [vmem:[#allocation5 + $0x8] sm:$0xff] %v155
    // Predicated region
    $region14: #{decoder_forward.1} parent=1 // pred_check
      _
    $region15: #{decoder_forward.1} parent=1 // pred_check_branch
      %159 = sbr.rel (0) target = $region17
    $region16: #{decoder_forward.1} parent=1 // pred_region
      %s161 = ssub.s32 256, 256
      %162 = vsyncadd [#allocation4], %s161
      %s164 = sshll.u32 [#allocation5], 4
      %s165 = int_to_ptr.vmem [resolvable:$true] %s164
      %167 = dma.vmem_to_hbm [thread:$0]  %s165, 256, %s2, [#allocation4]
    $region17: #{decoder_forward.1} parent=1 // pred_fallthru
      _
    // Predicated region
    $region18: #{decoder_forward.1} parent=1 // pred_check
      _
    $region19: #{decoder_forward.1} parent=1 // pred_check_branch
      %169 = sbr.rel (0) target = $region21
    $region20: #{decoder_forward.1} parent=1 // pred_region
      %170 = dma.done [#allocation4], 256
    $region21: #{decoder_forward.1} parent=1 // pred_fallthru
      _
    %171 = vsyncpa [#allocation3], 1
    %172 = vsyncpa [#allocation4], 1

</llo_original>
